<compile_context>
chip_gen: v5e
topology: v5e:2x2
jax: 0.10.0
libtpu: 0.0.40
codegen_flags: <defaults>
</compile_context>

<pallas_src>
import functools

import jax
import jax.numpy as jnp
from jax.experimental import pallas as pl
from jax.experimental.pallas import tpu as pltpu


# ----------------------------- kernel -------------------------------------- #

def _linear_embedding_kernel(x_ref, o_ref, *, size, scale):
    # Memory-bound elementwise hot path. Widen to f32, true divide, scale,
    # cast back on store. EUP/VALU cost is irrelevant at HBM roofline.
    xv = x_ref[...].astype(jnp.float32)
    o_ref[...] = ((xv / size) * scale).astype(o_ref.dtype)


# ----------------------------- tiling helpers ------------------------------ #

def _sublane_multiple(dtype) -> int:
    # f32 -> 8, bf16 -> 16, int8/fp8 -> 32 (sub-32-bit dtypes pack along sublanes).
    itemsize = jnp.dtype(dtype).itemsize
    return max(8, 32 // max(1, itemsize))


def _pick_blocks(rows: int, cols: int, dtype,
                 target_bytes: int = 2 << 20,      # ~2 MiB per tile
                 max_block_cols: int = 4096):
    itemsize = jnp.dtype(dtype).itemsize
    sub = _sublane_multiple(dtype)

    # Lane (last-dim) block: full extent if modest, else a big multiple of 128.
    if cols <= max_block_cols:
        bn = cols                      # equal-to-full-dim block is always legal
    else:
        bn = max_block_cols            # multiple of 128 -> unmasked vst

    # Row block: aim for ~target_bytes per tile, multiple of sublane packing.
    row_bytes = max(1, bn * itemsize)
    bm = max(sub, (target_bytes // row_bytes) // sub * sub)
    if bm >= rows:
        bm = rows                      # full-extent block is always legal
    return bm, bn


# ----------------------------- wrapper -------------------------------------- #

def linear_embedding(x: jax.Array, size: int, scale: float = 1.0, *,
                     use_pallas: bool | None = None,
                     min_pallas_bytes: int = 1 << 20,
                     block_rows: int | None = None,
                     block_cols: int | None = None) -> jax.Array:
    """Pallas implementation of LinearEmbedding.forward.

    Accepts any-rank x; returns x.shape + (1,) with x's dtype.
    `use_pallas=None` auto-selects: tiny inputs use a plain fused XLA multiply,
    larger inputs use the tiled Pallas kernel.
    """
    orig_shape = x.shape

    # Flatten to a 2-D lane-dense view [R, C] (unsqueeze(-1) handled at the end).
    if x.ndim == 0:
        x2 = x.reshape(1, 1)
    elif x.ndim == 1:
        x2 = x.reshape(1, x.shape[0])
    else:
        x2 = x.reshape(-1, x.shape[-1])
    R, C = x2.shape

    nbytes = x2.size * jnp.dtype(x2.dtype).itemsize
    if use_pallas is None:
        use_pallas = nbytes >= min_pallas_bytes

    if not use_pallas or R == 0 or C == 0:
        # Small-input fallback: a lone elementwise multiply is already an
        # optimal fused XLA loop; pallas_call fixed cost would dominate here.
        out = ((x.astype(jnp.float32) / float(size)) * float(scale)).astype(x.dtype)
        return out.reshape(orig_shape + (1,))

    bm, bn = _pick_blocks(R, C, x2.dtype)
    if block_rows is not None:
        bm = block_rows
    if block_cols is not None:
        bn = block_cols

    grid = (pl.cdiv(R, bm), pl.cdiv(C, bn))
    kernel = functools.partial(_linear_embedding_kernel,
                               size=float(size), scale=float(scale))

    out2d = pl.pallas_call(
        kernel,
        out_shape=jax.ShapeDtypeStruct((R, C), x2.dtype),
        grid_spec=pltpu.PrefetchScalarGridSpec(
            num_scalar_prefetch=0,
            grid=grid,
            in_specs=[pl.BlockSpec((bm, bn), lambda i, j: (i, j))],
            out_specs=pl.BlockSpec((bm, bn), lambda i, j: (i, j)),
        ),
        compiler_params=pltpu.CompilerParams(
            dimension_semantics=("parallel", "parallel")),
    )(x2)

    # unsqueeze(-1): pure metadata reshape, no data movement.
    return out2d.reshape(orig_shape + (1,))


def positional_embedding(x: jax.Array, size: int, type: str = "linear",
                         scale: float = 1.0, **kwargs) -> jax.Array:
    """Dispatcher mirroring PositionalEmbedding.forward."""
    if type == "linear":
        return linear_embedding(x, size, scale, **kwargs)
    if type == "identity":
        return x[..., None]                               # metadata-only
    if type == "zero":
        return jnp.zeros(x.shape + (1,), dtype=x.dtype)   # x.unsqueeze(-1) * 0
    # TODO(synk): 'sinusoidal' and 'learnable' variants (sin/cos outer product,
    # nn.Linear(1, size)) are not kernelized here.
    raise NotImplementedError(f"Unknown/unsupported positional embedding type: {type}")


# ----------------------------- demo / self-test ----------------------------- #

if __name__ == "__main__":
    key = jax.random.PRNGKey(0)
    size = 32
    scale = 2.0

    # 1) Main Pallas path: small 2-D batch of positions, force the kernel.
    k1, k2, k3 = jax.random.split(key, 3)
    x = jax.random.normal(k1, (64, 128), dtype=jnp.float32)
    out = linear_embedding(x, size=size, scale=scale, use_pallas=True)
    out = jax.block_until_ready(out)
    ref = (x / size * scale)[..., None]
    assert out.shape == (64, 128, 1), out.shape
    assert out.dtype == x.dtype
    assert jnp.allclose(out, ref, atol=1e-6, rtol=1e-6)

    # 2) bf16 input through the Pallas path (sublane packing path).
    xb = jax.random.normal(k2, (32, 256), dtype=jnp.bfloat16)
    outb = jax.block_until_ready(
        linear_embedding(xb, size=size, scale=scale, use_pallas=True))
    refb = ((xb.astype(jnp.float32) / size) * scale).astype(jnp.bfloat16)[..., None]
    assert outb.shape == (32, 256, 1) and outb.dtype == jnp.bfloat16
    assert jnp.allclose(outb.astype(jnp.float32), refb.astype(jnp.float32),
                        atol=1e-2, rtol=1e-2)

    # 3) Tiny 1-D timestep vector through the dispatcher (auto -> XLA fallback).
    t = jax.random.uniform(k3, (8,), dtype=jnp.float32) * size
    outt = jax.block_until_ready(
        positional_embedding(t, size=size, type="linear", scale=scale))
    assert outt.shape == (8, 1)
    assert jnp.allclose(outt, (t / size * scale)[..., None], atol=1e-6, rtol=1e-6)

    # 4) identity / zero variants of PositionalEmbedding.
    assert positional_embedding(t, size, "identity").shape == (8, 1)
    assert jnp.all(positional_embedding(t, size, "zero") == 0)

    print("KERNEL_OK")
</pallas_src>

<mosaic_0001>
module attributes {stable_mosaic.version = 11 : i64} {
  func.func @_linear_embedding_kernel(%arg0: i32, %arg1: i32, %arg2: memref<64x128xf32, #tpu.memory_space<vmem>>, %arg3: memref<64x128xf32, #tpu.memory_space<vmem>>) attributes {dimension_semantics = [#tpu.dimension_semantics<parallel>, #tpu.dimension_semantics<parallel>], iteration_bounds = array<i64: 1, 1>, scalar_prefetch = 0 : i64, scratch_operands = 0 : i64, tpu.core_type = #tpu.core_type<tc>, window_params = [{transform_indices = @transform_0, window_bounds = array<i64: 64, 128>}, {transform_indices = @transform_1, window_bounds = array<i64: 64, 128>}]} {
    %c0 = arith.constant 0 : index
    %c0_0 = arith.constant 0 : index
    %0 = vector.load %arg2[%c0, %c0_0] : memref<64x128xf32, #tpu.memory_space<vmem>>, vector<64x128xf32>
    %cst = arith.constant 3.200000e+01 : f32
    %1 = vector.broadcast %cst : f32 to vector<64x128xf32>
    %2 = arith.divf %0, %1 : vector<64x128xf32>
    %cst_1 = arith.constant 2.000000e+00 : f32
    %3 = vector.broadcast %cst_1 : f32 to vector<64x128xf32>
    %4 = arith.mulf %2, %3 : vector<64x128xf32>
    %c0_2 = arith.constant 0 : index
    %c0_3 = arith.constant 0 : index
    %5 = vector.load %arg3[%c0_2, %c0_3] : memref<64x128xf32, #tpu.memory_space<vmem>>, vector<64x128xf32>
    tpu.vector_store %arg3[%c0_2, %c0_3], %4 {strides = array<i32>} : memref<64x128xf32, #tpu.memory_space<vmem>>, vector<64x128xf32>,
    return
  }
  func.func @transform_0(%arg0: i32, %arg1: i32) -> (i32, i32) {
    %c0_i32 = arith.constant 0 : i32
    return %arg0, %arg1 : i32, i32
  }
  func.func @transform_1(%arg0: i32, %arg1: i32) -> (i32, i32) {
    %c0_i32 = arith.constant 0 : i32
    return %arg0, %arg1 : i32, i32
  }
}

</mosaic_0001>

<llo_original>
// kernel: tpu_custom_call.1
$region0: #{tpu_custom_call.1}
  #allocation0 [shape = 'u32[]', space=smem, size = 0x4, offset = 0x4, fixed_abs, tag = 'smem constant byte address 0x4 - core index']
  #allocation1 [shape = 'u32[72,128]{1,0:T(1,128)}', space=vmem, size = 0x9000, scoped, tag = 'internal scratch']
  %s0 = inlined_call_operand.hbm [shape: f32[64,128], index: 0, kind: input, shape index: {}]
  %s1 = inlined_call_operand.hbm [shape: f32[64,128], index: 1, kind: output, shape index: {}]
  %s2 = sld [smem:[#allocation0]]
  $region18: #{tpu_custom_call.1} parent=0
    _
  %s4 = ssub.s32 1, %s2
  %s5 = scalar_select 0, %s4, %s2
  $region1: #{tpu_custom_call.1} parent=0
    #allocation2 [shape = 'u8[32768]{0}', space=vmem, size = 0x8000, scoped, tag = 'input window, operand 0, single buffered']
    #allocation3 [shape = 's32[1]{0}', space=sflag, size = 0x4, scoped, tag = 'scoped memory for tpu_custom_call.1']
    #allocation4 [shape = 's32[1]{0}', space=sflag, size = 0x4, scoped, tag = 'scoped memory for tpu_custom_call.1']
    #allocation5 [shape = 'u8[32768]{0}', space=vmem, size = 0x8000, scoped, tag = 'output window, operand 0, single buffered']
    %6 = vsyncpa [#allocation3], 0
    %7 = vsyncpa [#allocation4], 0
    // Predicated region
    $region2: #{tpu_custom_call.1} parent=1 // pred_check
      _
    $region3: #{tpu_custom_call.1} parent=1 // pred_check_branch
      %9 = sbr.rel (0) target = $region5
    $region4: #{tpu_custom_call.1} parent=1 // pred_region
      %11 = vsyncadd [#allocation3], 0
      %s12 = sshll.u32 %s0, 4
      %s13 = int_to_ptr.hbm [resolvable:$true] %s12
      %s14 = sshll.u32 [#allocation2], 4
      %s15 = int_to_ptr.vmem [resolvable:$true] %s14
      %20 = dma.hbm_to_vmem [thread:$0]  %s13, 1024, %s15, [#allocation3], 128, 128, 8
    $region5: #{tpu_custom_call.1} parent=1 // pred_fallthru
      _
    // Predicated region
    $region6: #{tpu_custom_call.1} parent=1 // pred_check
      _
    $region7: #{tpu_custom_call.1} parent=1 // pred_check_branch
      %22 = sbr.rel (0) target = $region9
    $region8: #{tpu_custom_call.1} parent=1 // pred_region
      %24 = dma.done [#allocation3], 1024
    $region9: #{tpu_custom_call.1} parent=1 // pred_fallthru
      _
    %v25 = vld [vmem:[#allocation2] sm:$0xff]
    %v26 = vld [vmem:[#allocation2 + $0x8] sm:$0xff]
    %v27 = vld [vmem:[#allocation2 + $0x10] sm:$0xff]
    %v28 = vld [vmem:[#allocation2 + $0x18] sm:$0xff]
    %v29 = vld [vmem:[#allocation2 + $0x20] sm:$0xff]
    %v30 = vld [vmem:[#allocation2 + $0x28] sm:$0xff]
    %v31 = vld [vmem:[#allocation2 + $0x30] sm:$0xff]
    %v32 = vld [vmem:[#allocation2 + $0x38] sm:$0xff]
    %v33 = vrcp.pop 32.0
    %v34 = vmul.f32 32.0, %v33
    %v35 = vsub.f32 1.0, %v34
    %v36 = vmul.f32 %v33, %v35
    %v37 = vadd.f32 %v33, %v36
    %vm38 = vweird.f32 %v33
    %v39 = vsel %vm38, %v33, %v37
    %v40 = vmul.f32 %v25, %v39
    %v41 = vmul.f32 %v26, %v39
    %v42 = vmul.f32 %v27, %v39
    %v43 = vmul.f32 %v28, %v39
    %v44 = vmul.f32 %v29, %v39
    %v45 = vmul.f32 %v30, %v39
    %v46 = vmul.f32 %v31, %v39
    %v47 = vmul.f32 %v32, %v39
    %v48 = vmul.f32 %v40, 2.0
    %v49 = vmul.f32 %v41, 2.0
    %v50 = vmul.f32 %v42, 2.0
    %v51 = vmul.f32 %v43, 2.0
    %v52 = vmul.f32 %v44, 2.0
    %v53 = vmul.f32 %v45, 2.0
    %v54 = vmul.f32 %v46, 2.0
    %v55 = vmul.f32 %v47, 2.0
    %56 = vst [vmem:[#allocation5] sm:$0xff] %v48
    %57 = vst [vmem:[#allocation5 + $0x8] sm:$0xff] %v49
    %58 = vst [vmem:[#allocation5 + $0x10] sm:$0xff] %v50
    %59 = vst [vmem:[#allocation5 + $0x18] sm:$0xff] %v51
    %60 = vst [vmem:[#allocation5 + $0x20] sm:$0xff] %v52
    %61 = vst [vmem:[#allocation5 + $0x28] sm:$0xff] %v53
    %62 = vst [vmem:[#allocation5 + $0x30] sm:$0xff] %v54
    %63 = vst [vmem:[#allocation5 + $0x38] sm:$0xff] %v55
    // Predicated region
    $region10: #{tpu_custom_call.1} parent=1 // pred_check
      _
    $region11: #{tpu_custom_call.1} parent=1 // pred_check_branch
      %65 = sbr.rel (0) target = $region13
    $region12: #{tpu_custom_call.1} parent=1 // pred_region
      %67 = vsyncadd [#allocation4], 0
      %s68 = sshll.u32 [#allocation5], 4
      %s69 = int_to_ptr.vmem [resolvable:$true] %s68
      %s70 = sshll.u32 %s1, 4
      %s71 = int_to_ptr.hbm [resolvable:$true] %s70
      %76 = dma.vmem_to_hbm [thread:$0]  %s69, 1024, %s71, [#allocation4], 128, 128, 8
    $region13: #{tpu_custom_call.1} parent=1 // pred_fallthru
      _
    // Predicated region
    $region14: #{tpu_custom_call.1} parent=1 // pred_check
      _
    $region15: #{tpu_custom_call.1} parent=1 // pred_check_branch
      %78 = sbr.rel (0) target = $region17
    $region16: #{tpu_custom_call.1} parent=1 // pred_region
      %80 = dma.done [#allocation4], 1024
    $region17: #{tpu_custom_call.1} parent=1 // pred_fallthru
      _
    %81 = vsyncpa [#allocation3], 1
    %82 = vsyncpa [#allocation4], 1

</llo_original>
